<compile_context>
chip_gen: v7x
topology: tpu7x:2x2x1
jax: 0.10.0
libtpu: 0.0.40
codegen_flags: <defaults>
</compile_context>

<pallas_src>
import jax
import jax.numpy as jnp
from jax import lax
from jax.experimental import pallas as pl
from jax.experimental.pallas import tpu as pltpu

LANE = 128                            # lane width (last-dim tile)
CHUNK_ROWS = 512                      # rows per in-kernel compute chunk
TARGET_STEP_BYTES = 16 * 1024 * 1024  # bytes (both inputs) streamed per grid step
VMEM_LIMIT_BYTES = 48 * 1024 * 1024   # safe on v5e/v6e (128 MiB) and v7x (64 MiB/TC)
NCORES = 2                            # leading "parallel" grid axis (both TCs on v7x)


def _pow_gamma(x, gamma):
    """x**gamma without float-exponent pow for small integer gamma."""
    g = float(gamma)
    if g.is_integer() and 0 <= g <= 8:
        n = int(g)
        if n == 0:
            return jnp.ones_like(x)
        out = x
        for _ in range(n - 1):
            out = out * x
        return out
    return x ** jnp.float32(g)


def _focal_elems(x, t, alpha, gamma):
    """Elementwise focal loss in f32 (shared by the kernel body and JAX tail)."""
    x = x.astype(jnp.float32)
    t = t.astype(jnp.float32)
    # Stable BCE-with-logits (== torch BCEWithLogitsLoss, reduction='none')
    bce = jnp.maximum(x, 0.0) - x * t + jnp.log1p(jnp.exp(-jnp.abs(x)))
    pt = jnp.exp(-bce)
    focal = _pow_gamma(1.0 - pt, gamma) * bce
    if float(alpha) != 1.0:           # skip the mul entirely when alpha == 1
        focal = jnp.float32(alpha) * focal
    return focal


def _make_focal_kernel(alpha, gamma, m_valid, tm, chunk, nbc, needs_mask):
    """Kernel factory.  m_valid = number of valid rows in the [M,128] view."""
    nchunks = tm // chunk

    def kernel(x_ref, t_ref, out_ref):
        c = pl.program_id(0)
        j = pl.program_id(1)

        @pl.when(j == 0)
        def _():
            out_ref[...] = jnp.zeros_like(out_ref)

        blk = c * nbc + j             # logical row-block index for this step

        def run(masked):
            # Chunked compute: bounds elementwise temporaries to ~chunk*128*4B
            # each while the DMA block (tm rows) stays large for amortization.
            @pl.loop(0, nchunks)
            def _(ic):
                r0 = pl.multiple_of(ic * chunk, chunk)
                f = _focal_elems(x_ref[pl.ds(r0, chunk), :],
                                 t_ref[pl.ds(r0, chunk), :],
                                 alpha, gamma)
                if masked:
                    rows = (blk * tm + r0
                            + lax.broadcasted_iota(jnp.int32, (chunk, 1), 0))
                    f = jnp.where(rows < m_valid, f, 0.0)
                # Pure-VPU accumulation into the resident (1,8,128) out block.
                out_ref[...] += f.reshape(chunk // 8, 8, LANE).sum(axis=0)[None]

        if not needs_mask:
            run(False)                # trace-time: no block can ever be partial
        else:
            # Only the last real block and clamped surplus blocks need masking.
            is_clean = (blk + 1) * tm <= m_valid

            @pl.when(is_clean)
            def _():
                run(False)

            @pl.when(jnp.logical_not(is_clean))
            def _():
                run(True)

    return kernel


def focal_loss(inputs, targets, alpha=1.0, gamma=2.0, reduction="mean"):
    """Pallas TPU implementation of FocalLoss.forward for 'mean'/'sum'."""
    assert inputs.shape == targets.shape
    # TODO(synk): reduction='none' (per-element output) is not implemented in
    # the kernel path; the module default ('mean') and 'sum' are supported.
    assert reduction in ("mean", "sum")

    total = inputs.size
    flat_x = inputs.reshape(-1)       # keep original dtype (bf16 stays bf16)
    flat_t = targets.reshape(-1)

    isx = jnp.dtype(inputs.dtype).itemsize
    ist = jnp.dtype(targets.dtype).itemsize
    sub = max(8, 32 // min(isx, ist))  # sublane tile of the narrowest dtype

    lane_tail = total % LANE
    main = total - lane_tail          # multiple of 128
    M = main // LANE                  # rows in the [M, 128] view

    loss_sum = jnp.float32(0.0)
    covered = 0

    if M >= sub:
        # ---- block-size selection (dtype-aware, step-overhead amortizing) ----
        if M < CHUNK_ROWS:
            TM = (M // sub) * sub
        else:
            bytes_per_row = LANE * (isx + ist)
            cap = (TARGET_STEP_BYTES // bytes_per_row) // CHUNK_ROWS * CHUNK_ROWS
            cap = max(cap, CHUNK_ROWS)
            TM = min(cap, (M // CHUNK_ROWS) * CHUNK_ROWS)
        chunk = min(CHUNK_ROWS, TM)

        NB = pl.cdiv(M, TM)           # row-blocks covering all M rows
        NBC = pl.cdiv(NB, NCORES)     # row-blocks per core
        needs_mask = (M % TM != 0) or (NCORES * NBC != NB)

        if lane_tail == 0:
            # Contiguous reshape -> bitcast view, no HBM copy.
            x2d = flat_x.reshape(M, LANE)
            t2d = flat_t.reshape(M, LANE)
        else:
            # NOTE: only hit when total % 128 != 0; XLA may materialize this
            # prefix slice as a copy.  Pad caller-side once if that matters.
            x2d = flat_x[:main].reshape(M, LANE)
            t2d = flat_t[:main].reshape(M, LANE)

        def in_map(c, j):
            # Clamp so surplus grid points re-read the last valid block
            # (their contribution is zeroed by the in-kernel row mask).
            return (jnp.minimum(c * NBC + j, NB - 1), 0)

        kernel = _make_focal_kernel(alpha, gamma, M, TM, chunk, NBC, needs_mask)

        acc = pl.pallas_call(
            kernel,
            out_shape=jax.ShapeDtypeStruct((NCORES, 8, LANE), jnp.float32),
            grid_spec=pltpu.PrefetchScalarGridSpec(
                num_scalar_prefetch=0,
                grid=(NCORES, NBC),
                in_specs=[
                    pl.BlockSpec((TM, LANE), in_map),
                    pl.BlockSpec((TM, LANE), in_map),
                ],
                out_specs=pl.BlockSpec((1, 8, LANE), lambda c, j: (c, 0, 0)),
            ),
            compiler_params=pltpu.CompilerParams(
                dimension_semantics=("parallel", "arbitrary"),
                vmem_limit_bytes=VMEM_LIMIT_BYTES,
            ),
        )(x2d, t2d)

        loss_sum = loss_sum + jnp.sum(acc)
        covered = main

    if covered < total:
        # <128 leftover elements (or a tiny input): plain JAX is cheaper than
        # padding/copying the arrays just to make them tile-divisible.
        loss_sum = loss_sum + jnp.sum(
            _focal_elems(flat_x[covered:], flat_t[covered:], alpha, gamma))

    if reduction == "mean":
        return loss_sum / jnp.float32(total)
    return loss_sum


def focal_loss_ref(inputs, targets, alpha=1.0, gamma=2.0, reduction="mean"):
    x = inputs.astype(jnp.float32)
    t = targets.astype(jnp.float32)
    bce = jnp.maximum(x, 0.0) - x * t + jnp.log1p(jnp.exp(-jnp.abs(x)))
    pt = jnp.exp(-bce)
    focal = alpha * (1.0 - pt) ** gamma * bce
    return focal.mean() if reduction == "mean" else focal.sum()


if __name__ == "__main__":
    key = jax.random.PRNGKey(0)
    k1, k2, k3, k4 = jax.random.split(key, 4)

    # Primary check: NCHW-style logits/targets, [2, 4, 16, 16] (tile-aligned).
    inputs = jax.random.normal(k1, (2, 4, 16, 16), dtype=jnp.float32) * 2.0
    targets = (jax.random.uniform(k2, (2, 4, 16, 16)) > 0.5).astype(jnp.float32)

    out = focal_loss(inputs, targets, alpha=1.0, gamma=2.0, reduction="mean")
    out = jax.block_until_ready(out)
    ref = focal_loss_ref(inputs, targets)
    assert jnp.allclose(out, ref, rtol=1e-5, atol=1e-6), (out, ref)

    # Secondary check: awkward shape exercising the masked partial block,
    # the clamped surplus block and the <128-element JAX tail.
    inputs2 = jax.random.normal(k3, (3, 5, 17, 13), dtype=jnp.float32) * 2.0
    targets2 = (jax.random.uniform(k4, (3, 5, 17, 13)) > 0.5).astype(jnp.float32)

    out2 = focal_loss(inputs2, targets2, alpha=1.0, gamma=2.0, reduction="mean")
    out2 = jax.block_until_ready(out2)
    ref2 = focal_loss_ref(inputs2, targets2)
    assert jnp.allclose(out2, ref2, rtol=1e-5, atol=1e-6), (out2, ref2)

    print("KERNEL_OK")
</pallas_src>

<mosaic_0001>
module attributes {stable_mosaic.version = 11 : i64} {
  func.func @kernel(%arg0: i32, %arg1: i32, %arg2: memref<16x128xf32, #tpu.memory_space<vmem>>, %arg3: memref<16x128xf32, #tpu.memory_space<vmem>>, %arg4: memref<1x8x128xf32, #tpu.memory_space<vmem>>) attributes {dimension_semantics = [#tpu.dimension_semantics<parallel>, #tpu.dimension_semantics<arbitrary>], iteration_bounds = array<i64: 2, 1>, scalar_prefetch = 0 : i64, scratch_operands = 0 : i64, tpu.core_type = #tpu.core_type<tc>, window_params = [{transform_indices = @transform_0, window_bounds = array<i64: 16, 128>}, {transform_indices = @transform_1, window_bounds = array<i64: 16, 128>}, {transform_indices = @transform_2, window_bounds = array<i64: 1, 8, 128>}]} {
    %c0_i32 = arith.constant 0 : i32
    %0 = arith.cmpi eq, %arg1, %c0_i32 : i32
    %1 = arith.extui %0 : i1 to i32
    %c0_i32_0 = arith.constant 0 : i32
    %2 = arith.cmpi ne, %1, %c0_i32_0 : i32
    scf.if %2 {
      %cst = arith.constant 0.000000e+00 : f32
      %13 = vector.broadcast %cst : f32 to vector<1x8x128xf32>
      %c0 = arith.constant 0 : index
      %c0_5 = arith.constant 0 : index
      %c0_6 = arith.constant 0 : index
      %14 = vector.load %arg4[%c0, %c0_5, %c0_6] : memref<1x8x128xf32, #tpu.memory_space<vmem>>, vector<1x8x128xf32>
      tpu.vector_store %arg4[%c0, %c0_5, %c0_6], %13 {strides = array<i32>} : memref<1x8x128xf32, #tpu.memory_space<vmem>>, vector<1x8x128xf32>,
    } else {
    }
    %c1_i32 = arith.constant 1 : i32
    %3 = arith.muli %arg0, %c1_i32 : i32
    %4 = arith.addi %3, %arg1 : i32
    %c1_i32_1 = arith.constant 1 : i32
    %5 = arith.addi %4, %c1_i32_1 : i32
    %c16_i32 = arith.constant 16 : i32
    %6 = arith.muli %5, %c16_i32 : i32
    %c16_i32_2 = arith.constant 16 : i32
    %7 = arith.cmpi sle, %6, %c16_i32_2 : i32
    %8 = arith.extui %7 : i1 to i32
    %c0_i32_3 = arith.constant 0 : i32
    %9 = arith.cmpi ne, %8, %c0_i32_3 : i32
    scf.if %9 {
      %c0_i32_5 = arith.constant 0 : i32
      %c1_i32_6 = arith.constant 1 : i32
      %13 = arith.muli %c0_i32_5, %c1_i32_6 : i32
      %c0_i32_7 = arith.constant 0 : i32
      %14 = arith.addi %c0_i32_7, %13 : i32
      %c16_i32_8 = arith.constant 16 : i32
      %15 = arith.muli %14, %c16_i32_8 : i32
      %16 = tpu.assume_multiple %15, 16 : i32
      %17 = arith.index_cast %16 : i32 to index
      %c0 = arith.constant 0 : index
      %18 = vector.load %arg2[%17, %c0] : memref<16x128xf32, #tpu.memory_space<vmem>>, vector<16x128xf32>
      %19 = arith.index_cast %16 : i32 to index
      %c0_9 = arith.constant 0 : index
      %20 = vector.load %arg3[%19, %c0_9] : memref<16x128xf32, #tpu.memory_space<vmem>>, vector<16x128xf32>
      %cst = arith.constant 0.000000e+00 : f32
      %21 = vector.broadcast %cst : f32 to vector<16x128xf32>
      %22 = arith.maximumf %18, %21 : vector<16x128xf32>
      %23 = arith.mulf %18, %20 : vector<16x128xf32>
      %24 = arith.subf %22, %23 : vector<16x128xf32>
      %25 = math.absf %18 : vector<16x128xf32>
      %cst_10 = arith.constant 0.000000e+00 : f32
      %26 = vector.broadcast %cst_10 : f32 to vector<16x128xf32>
      %27 = arith.subf %26, %25 : vector<16x128xf32>
      %28 = math.exp %27 : vector<16x128xf32>
      %29 = math.log1p %28 : vector<16x128xf32>
      %30 = arith.addf %24, %29 : vector<16x128xf32>
      %cst_11 = arith.constant 0.000000e+00 : f32
      %31 = vector.broadcast %cst_11 : f32 to vector<16x128xf32>
      %32 = arith.subf %31, %30 : vector<16x128xf32>
      %33 = math.exp %32 : vector<16x128xf32>
      %cst_12 = arith.constant 1.000000e+00 : f32
      %34 = vector.broadcast %cst_12 : f32 to vector<16x128xf32>
      %35 = arith.subf %34, %33 : vector<16x128xf32>
      %36 = arith.mulf %35, %35 : vector<16x128xf32>
      %37 = arith.mulf %36, %30 : vector<16x128xf32>
      %c0_13 = arith.constant 0 : index
      %c0_14 = arith.constant 0 : index
      %c0_15 = arith.constant 0 : index
      %38 = vector.load %arg4[%c0_13, %c0_14, %c0_15] : memref<1x8x128xf32, #tpu.memory_space<vmem>>, vector<1x8x128xf32>
      %39 = vector.shape_cast %37 : vector<16x128xf32> to vector<2x8x128xf32>
      %cst_16 = arith.constant dense<0.000000e+00> : vector<8x128xf32>
      %40 = vector.multi_reduction <add>, %39, %cst_16 [0] : vector<2x8x128xf32> to vector<8x128xf32>
      %41 = vector.shape_cast %40 : vector<8x128xf32> to vector<1x8x128xf32>
      %42 = arith.addf %38, %41 : vector<1x8x128xf32>
      %c0_17 = arith.constant 0 : index
      %c0_18 = arith.constant 0 : index
      %c0_19 = arith.constant 0 : index
      %43 = vector.load %arg4[%c0_17, %c0_18, %c0_19] : memref<1x8x128xf32, #tpu.memory_space<vmem>>, vector<1x8x128xf32>
      tpu.vector_store %arg4[%c0_17, %c0_18, %c0_19], %42 {strides = array<i32>} : memref<1x8x128xf32, #tpu.memory_space<vmem>>, vector<1x8x128xf32>,
      %c1_i32_20 = arith.constant 1 : i32
    } else {
    }
    %true = arith.constant true
    %10 = arith.xori %7, %true : i1
    %11 = arith.extui %10 : i1 to i32
    %c0_i32_4 = arith.constant 0 : i32
    %12 = arith.cmpi ne, %11, %c0_i32_4 : i32
    scf.if %12 {
      %c0_i32_5 = arith.constant 0 : i32
      %c1_i32_6 = arith.constant 1 : i32
      %13 = arith.muli %c0_i32_5, %c1_i32_6 : i32
      %c0_i32_7 = arith.constant 0 : i32
      %14 = arith.addi %c0_i32_7, %13 : i32
      %c16_i32_8 = arith.constant 16 : i32
      %15 = arith.muli %14, %c16_i32_8 : i32
      %16 = tpu.assume_multiple %15, 16 : i32
      %17 = arith.index_cast %16 : i32 to index
      %c0 = arith.constant 0 : index
      %18 = vector.load %arg2[%17, %c0] : memref<16x128xf32, #tpu.memory_space<vmem>>, vector<16x128xf32>
      %19 = arith.index_cast %16 : i32 to index
      %c0_9 = arith.constant 0 : index
      %20 = vector.load %arg3[%19, %c0_9] : memref<16x128xf32, #tpu.memory_space<vmem>>, vector<16x128xf32>
      %cst = arith.constant 0.000000e+00 : f32
      %21 = vector.broadcast %cst : f32 to vector<16x128xf32>
      %22 = arith.maximumf %18, %21 : vector<16x128xf32>
      %23 = arith.mulf %18, %20 : vector<16x128xf32>
      %24 = arith.subf %22, %23 : vector<16x128xf32>
      %25 = math.absf %18 : vector<16x128xf32>
      %cst_10 = arith.constant 0.000000e+00 : f32
      %26 = vector.broadcast %cst_10 : f32 to vector<16x128xf32>
      %27 = arith.subf %26, %25 : vector<16x128xf32>
      %28 = math.exp %27 : vector<16x128xf32>
      %29 = math.log1p %28 : vector<16x128xf32>
      %30 = arith.addf %24, %29 : vector<16x128xf32>
      %cst_11 = arith.constant 0.000000e+00 : f32
      %31 = vector.broadcast %cst_11 : f32 to vector<16x128xf32>
      %32 = arith.subf %31, %30 : vector<16x128xf32>
      %33 = math.exp %32 : vector<16x128xf32>
      %cst_12 = arith.constant 1.000000e+00 : f32
      %34 = vector.broadcast %cst_12 : f32 to vector<16x128xf32>
      %35 = arith.subf %34, %33 : vector<16x128xf32>
      %36 = arith.mulf %35, %35 : vector<16x128xf32>
      %37 = arith.mulf %36, %30 : vector<16x128xf32>
      %c16_i32_13 = arith.constant 16 : i32
      %38 = arith.muli %4, %c16_i32_13 : i32
      %39 = arith.addi %38, %16 : i32
      %40 = tpu.iota {dimensions = array<i32: 0>} : vector<16x1xi32>
      %41 = vector.broadcast %39 : i32 to vector<16x1xi32>
      %42 = arith.addi %41, %40 : vector<16x1xi32>
      %c16_i32_14 = arith.constant 16 : i32
      %43 = vector.broadcast %c16_i32_14 : i32 to vector<16x1xi32>
      %44 = arith.cmpi slt, %42, %43 : vector<16x1xi32>
      %cst_15 = arith.constant 0.000000e+00 : f32
      %45 = vector.shape_cast %44 : vector<16x1xi1> to vector<16x1xi1>
      %46 = vector.broadcast %45 : vector<16x1xi1> to vector<16x128xi1>
      %47 = vector.broadcast %cst_15 : f32 to vector<16x128xf32>
      %48 = arith.select %46, %37, %47 : vector<16x128xi1>, vector<16x128xf32>
      %c0_16 = arith.constant 0 : index
      %c0_17 = arith.constant 0 : index
      %c0_18 = arith.constant 0 : index
      %49 = vector.load %arg4[%c0_16, %c0_17, %c0_18] : memref<1x8x128xf32, #tpu.memory_space<vmem>>, vector<1x8x128xf32>
      %50 = vector.shape_cast %48 : vector<16x128xf32> to vector<2x8x128xf32>
      %cst_19 = arith.constant dense<0.000000e+00> : vector<8x128xf32>
      %51 = vector.multi_reduction <add>, %50, %cst_19 [0] : vector<2x8x128xf32> to vector<8x128xf32>
      %52 = vector.shape_cast %51 : vector<8x128xf32> to vector<1x8x128xf32>
      %53 = arith.addf %49, %52 : vector<1x8x128xf32>
      %c0_20 = arith.constant 0 : index
      %c0_21 = arith.constant 0 : index
      %c0_22 = arith.constant 0 : index
      %54 = vector.load %arg4[%c0_20, %c0_21, %c0_22] : memref<1x8x128xf32, #tpu.memory_space<vmem>>, vector<1x8x128xf32>
      tpu.vector_store %arg4[%c0_20, %c0_21, %c0_22], %53 {strides = array<i32>} : memref<1x8x128xf32, #tpu.memory_space<vmem>>, vector<1x8x128xf32>,
      %c1_i32_23 = arith.constant 1 : i32
    } else {
    }
    return
  }
  func.func @transform_0(%arg0: i32, %arg1: i32) -> (i32, i32) {
    %c1_i32 = arith.constant 1 : i32
    %0 = arith.muli %arg0, %c1_i32 : i32
    %1 = arith.addi %0, %arg1 : i32
    %c0_i32 = arith.constant 0 : i32
    %2 = arith.minsi %1, %c0_i32 : i32
    %c0_i32_0 = arith.constant 0 : i32
    %c0_i32_1 = arith.constant 0 : i32
    return %2, %c0_i32_0 : i32, i32
  }
  func.func @transform_1(%arg0: i32, %arg1: i32) -> (i32, i32) {
    %c1_i32 = arith.constant 1 : i32
    %0 = arith.muli %arg0, %c1_i32 : i32
    %1 = arith.addi %0, %arg1 : i32
    %c0_i32 = arith.constant 0 : i32
    %2 = arith.minsi %1, %c0_i32 : i32
    %c0_i32_0 = arith.constant 0 : i32
    %c0_i32_1 = arith.constant 0 : i32
    return %2, %c0_i32_0 : i32, i32
  }
  func.func @transform_2(%arg0: i32, %arg1: i32) -> (i32, i32, i32) {
    %c0_i32 = arith.constant 0 : i32
    %c0_i32_0 = arith.constant 0 : i32
    %c0_i32_1 = arith.constant 0 : i32
    return %arg0, %c0_i32, %c0_i32_0 : i32, i32, i32
  }
}

</mosaic_0001>

<llo_original>
// kernel: tpu_custom_call.1
$region0: #{tpu_custom_call.1}
  #allocation0 [shape = 'u32[]', space=smem, size = 0x4, offset = 0x4, fixed_abs, tag = 'smem constant byte address 0x4 - core index']
  #allocation1 [shape = 'u32[144,128]{1,0:T(1,128)}', space=vmem, size = 0x12000, scoped, tag = 'internal scratch']
  %s0 = inlined_call_operand.hbm [shape: f32[16,128], index: 0, kind: input, shape index: {}]
  %s1 = inlined_call_operand.hbm [shape: f32[16,128], index: 1, kind: input, shape index: {}]
  %s2 = inlined_call_operand.hbm [shape: f32[2,8,128], index: 2, kind: output, shape index: {}]
  %s3 = sld [smem:[#allocation0]]
  $region61: #{tpu_custom_call.1} parent=0
    _
  %s5 = ssub.s32 1, %s3
  %s6 = scalar_select 0, %s5, %s3
  $region1: #{tpu_custom_call.1} parent=0
    #allocation2 [shape = 'u8[16384]{0}', space=vmem, size = 0x4000, scoped, tag = 'input window, operand 0']
    #allocation3 [shape = 's32[2]{0}', space=sflag, size = 0x8, scoped, tag = 'scoped memory for tpu_custom_call.1']
    #allocation4 [shape = 's32[2]{0}', space=sflag, size = 0x8, scoped, tag = 'scoped memory for tpu_custom_call.1']
    #allocation5 [shape = 'u8[16384]{0}', space=vmem, size = 0x4000, scoped, tag = 'input window, operand 1']
    #allocation6 [shape = 's32[2]{0}', space=sflag, size = 0x8, scoped, tag = 'scoped memory for tpu_custom_call.1']
    #allocation7 [shape = 'u8[8192]{0}', space=vmem, size = 0x2000, scoped, tag = 'output window, operand 0']
    %7 = vsyncpa [#allocation3], 0
    %s8 = scalar_lea.sflag [#allocation3], 1
    %9 = vsyncpa %s8, 0
    %10 = vsyncpa [#allocation6], 0
    %s11 = scalar_lea.sflag [#allocation6], 1
    %12 = vsyncpa %s11, 0
    %13 = vsyncpa [#allocation4], 0
    %s14 = scalar_lea.sflag [#allocation4], 1
    %15 = vsyncpa %s14, 0
    loop: start=0, step=1, limit=4
    $region2: #{tpu_custom_call.1} parent=1 // loop_pre_header
      _
    $region3: #{tpu_custom_call.1} parent=1 // loop_header
      %s17 = sphi 0, %s21
      %p18 = scmp.ge.s32.totalorder %s17, 4
      %s24 = sphi 0, %s36
      %s25 = sphi 0, %s32
      %s26 = sphi 0, %s24
      %s27 = sphi 0, %s25
      %s28 = sphi 0, %s26
      %s29 = sphi 0, %s27
      %s45 = sphi 0, %s47
      %s48 = sphi 0, %s45
      %s49 = sphi 0, %s48
      %s65 = sphi 0, %s49
      %s77 = sphi 0, %s79
      %s80 = sphi 0, %s77
      %s81 = sphi 0, %s80
      %s97 = sphi 0, %s81
      %s103 = sphi 0, %s105
      %s106 = sphi 0, %s103
      %s107 = sphi 0, %s106
      %s123 = sphi 0, %s107
    $region4: #{tpu_custom_call.1} parent=1 // loop_header_branch
      %20 = sbr.rel (%p18) target = $region8
    $region5: #{tpu_custom_call.1} parent=1 // loop_body
      %s22 = ssub.s32 %s17, 1
      %s23 = ssub.s32 %s17, 2
      %s30 = sadd.s32 1, %s25
      %p31 = scmp.ge.s32.totalorder %s30, 1
      %s32 = scalar_select %p31, 0, %s30
      %s33 = sadd.s32 1, %s24
      %s34 = scalar_select %p31, %s33, %s24
      %p35 = scmp.ge.s32.totalorder %s34, 2
      %s36 = scalar_select %p35, 0, %s34
      %s37 = sadd.s32 %s24, %s25
      %p38 = scmp.lt.s32.totalorder %s37, 0
      %s39 = scalar_select %p38, %s37, 0
      %s40 = sadd.s32 %s36, %s32
      %p41 = scmp.lt.s32.totalorder %s40, 0
      %s42 = scalar_select %p41, %s40, 0
      %s43 = ssub.s32 %s39, %s42
      %p44 = scmp.eq.s32.totalorder %s43, 0
      %s46 = sadd.s32 %s45, 1
      %s47 = scalar_select %p44, %s45, %s46
      %p50 = pneg %p44
      %p51 = scmp.eq.s32.totalorder %s17, 1
      %p52 = por %p50, %p51
      %p53 = scmp.ne.s32.totalorder %s45, %s48
      %p54 = scmp.eq.s32.totalorder %s17, 0
      %p55 = por %p53, %p54
      %p56 = scmp.ne.s32.totalorder %s45, %s48
      %p57 = scmp.eq.s32.totalorder %s22, 1
      %p58 = por %p56, %p57
      %p59 = scmp.ne.s32.totalorder %s48, %s49
      %p60 = scmp.eq.s32.totalorder %s22, 0
      %p61 = por %p59, %p60
      %p62 = scmp.ne.s32.totalorder %s48, %s49
      %p63 = scmp.eq.s32.totalorder %s23, 1
      %p64 = por %p62, %p63
      %p66 = scmp.ne.s32.totalorder %s49, %s65
      %p67 = scmp.eq.s32.totalorder %s23, 0
      %p68 = por %p66, %p67
      %s69 = sadd.s32 %s24, %s25
      %p70 = scmp.lt.s32.totalorder %s69, 0
      %s71 = scalar_select %p70, %s69, 0
      %s72 = sadd.s32 %s36, %s32
      %p73 = scmp.lt.s32.totalorder %s72, 0
      %s74 = scalar_select %p73, %s72, 0
      %s75 = ssub.s32 %s71, %s74
      %p76 = scmp.eq.s32.totalorder %s75, 0
      %s78 = sadd.s32 %s77, 1
      %s79 = scalar_select %p76, %s77, %s78
      %p82 = pneg %p76
      %p83 = scmp.eq.s32.totalorder %s17, 1
      %p84 = por %p82, %p83
      %p85 = scmp.ne.s32.totalorder %s77, %s80
      %p86 = scmp.eq.s32.totalorder %s17, 0
      %p87 = por %p85, %p86
      %p88 = scmp.ne.s32.totalorder %s77, %s80
      %p89 = scmp.eq.s32.totalorder %s22, 1
      %p90 = por %p88, %p89
      %p91 = scmp.ne.s32.totalorder %s80, %s81
      %p92 = scmp.eq.s32.totalorder %s22, 0
      %p93 = por %p91, %p92
      %p94 = scmp.ne.s32.totalorder %s80, %s81
      %p95 = scmp.eq.s32.totalorder %s23, 1
      %p96 = por %p94, %p95
      %p98 = scmp.ne.s32.totalorder %s81, %s97
      %p99 = scmp.eq.s32.totalorder %s23, 0
      %p100 = por %p98, %p99
      %s101 = ssub.s32 %s24, %s36
      %p102 = scmp.eq.s32.totalorder %s101, 0
      %s104 = sadd.s32 %s103, 1
      %s105 = scalar_select %p102, %s103, %s104
      %p108 = pneg %p102
      %p109 = scmp.eq.s32.totalorder %s17, 1
      %p110 = por %p108, %p109
      %p111 = scmp.ne.s32.totalorder %s103, %s106
      %p112 = scmp.eq.s32.totalorder %s17, 0
      %p113 = por %p111, %p112
      %p114 = scmp.ne.s32.totalorder %s103, %s106
      %p115 = scmp.eq.s32.totalorder %s22, 1
      %p116 = por %p114, %p115
      %p117 = scmp.ne.s32.totalorder %s106, %s107
      %p118 = scmp.eq.s32.totalorder %s22, 0
      %p119 = por %p117, %p118
      %p120 = scmp.ne.s32.totalorder %s106, %s107
      %p121 = scmp.eq.s32.totalorder %s23, 1
      %p122 = por %p120, %p121
      %p124 = scmp.ne.s32.totalorder %s107, %s123
      %p125 = scmp.eq.s32.totalorder %s23, 0
      %p126 = por %p124, %p125
      %p127 = scmp.le.s32.totalorder 1, %s17
      %p128 = scmp.lt.s32.totalorder %s17, 3
      %p129 = pnand %p127, %p128
      %p130 = pneg %p129
      // Predicated region
      $region9: #{tpu_custom_call.1} parent=5 // pred_check
        _
      $region10: #{tpu_custom_call.1} parent=5 // pred_check_branch
        %132 = sbr.rel (%p129) target = $region12
      $region11: #{tpu_custom_call.1} parent=5 // pred_region
        %s133 = ssub.s32 %s17, 1
      $region12: #{tpu_custom_call.1} parent=5 // pred_fallthru
        _
      %p134 = scmp.lt.s32.totalorder %s17, 2
      // Predicated region
      $region13: #{tpu_custom_call.1} parent=5 // pred_check
        %p135 = pneg %p134
      $region14: #{tpu_custom_call.1} parent=5 // pred_check_branch
        %137 = sbr.rel (%p135) target = $region16
      $region15: #{tpu_custom_call.1} parent=5 // pred_region
        // Predicated region
        $region17: #{tpu_custom_call.1} parent=15 // pred_check
          %p138 = pneg %p55
        $region18: #{tpu_custom_call.1} parent=15 // pred_check_branch
          %140 = sbr.rel (%p138) target = $region20
        $region19: #{tpu_custom_call.1} parent=15 // pred_region
          %s141 = sand.u32 %s45, 1
          %s142 = scalar_lea.sflag [#allocation3], %s141
          %s143 = sand.u32 %s45, 1
          %s144 = smul.addr %s143, 16
          %s145 = scalar_lea.vmem [#allocation2], %s144
          %s146 = sadd.s32 %s24, %s25
          %p147 = scmp.lt.s32.totalorder %s146, 0
          %s148 = scalar_select %p147, %s146, 0
          %s149 = smul.u32 2, %s148
          %s151 = ssub.s32 256, 256
          %152 = vsyncadd %s142, %s151
          %s153 = smul.addr %s149, 128
          %s154 = scalar_lea.hbm %s0, %s153
          %s155 = sshll.u32 %s145, 4
          %s156 = int_to_ptr.vmem [resolvable:$true] %s155
          %161 = dma.hbm_to_vmem [thread:$0]  %s154, 256, %s156, %s142, 128, 128, 8
        $region20: #{tpu_custom_call.1} parent=15 // pred_fallthru
          _
        // Predicated region
        $region21: #{tpu_custom_call.1} parent=15 // pred_check
          %p162 = pneg %p87
        $region22: #{tpu_custom_call.1} parent=15 // pred_check_branch
          %164 = sbr.rel (%p162) target = $region24
        $region23: #{tpu_custom_call.1} parent=15 // pred_region
          %s165 = sand.u32 %s77, 1
          %s166 = scalar_lea.sflag [#allocation6], %s165
          %s167 = sand.u32 %s77, 1
          %s168 = smul.addr %s167, 16
          %s169 = scalar_lea.vmem [#allocation5], %s168
          %s170 = sadd.s32 %s24, %s25
          %p171 = scmp.lt.s32.totalorder %s170, 0
          %s172 = scalar_select %p171, %s170, 0
          %s173 = smul.u32 2, %s172
          %s175 = ssub.s32 256, 256
          %176 = vsyncadd %s166, %s175
          %s177 = smul.addr %s173, 128
          %s178 = scalar_lea.hbm %s1, %s177
          %s179 = sshll.u32 %s169, 4
          %s180 = int_to_ptr.vmem [resolvable:$true] %s179
          %185 = dma.hbm_to_vmem [thread:$0]  %s178, 256, %s180, %s166, 128, 128, 8
        $region24: #{tpu_custom_call.1} parent=15 // pred_fallthru
          _
      $region16: #{tpu_custom_call.1} parent=5 // pred_fallthru
        _
      %p186 = scmp.le.s32.totalorder 1, %s17
      %p187 = scmp.lt.s32.totalorder %s17, 3
      %p188 = pnand %p186, %p187
      %p189 = pneg %p188
      // Predicated region
      $region25: #{tpu_custom_call.1} parent=5 // pred_check
        _
      $region26: #{tpu_custom_call.1} parent=5 // pred_check_branch
        %191 = sbr.rel (%p188) target = $region28
      $region27: #{tpu_custom_call.1} parent=5 // pred_region
        %s192 = ssub.s32 %s17, 1
        %s193 = sand.u32 %s48, 1
        %s194 = scalar_lea.sflag [#allocation3], %s193
        %s195 = sand.u32 %s48, 1
        %s196 = smul.addr %s195, 16
        %s197 = scalar_lea.vmem [#allocation2], %s196
        // Predicated region
        $region29: #{tpu_custom_call.1} parent=27 // pred_check
          %p198 = pneg %p61
        $region30: #{tpu_custom_call.1} parent=27 // pred_check_branch
          %200 = sbr.rel (%p198) target = $region32
        $region31: #{tpu_custom_call.1} parent=27 // pred_region
          %201 = dma.done %s194, 256
        $region32: #{tpu_custom_call.1} parent=27 // pred_fallthru
          _
        %s202 = sand.u32 %s80, 1
        %s203 = scalar_lea.sflag [#allocation6], %s202
        %s204 = sand.u32 %s80, 1
        %s205 = smul.addr %s204, 16
        %s206 = scalar_lea.vmem [#allocation5], %s205
        // Predicated region
        $region33: #{tpu_custom_call.1} parent=27 // pred_check
          %p207 = pneg %p93
        $region34: #{tpu_custom_call.1} parent=27 // pred_check_branch
          %209 = sbr.rel (%p207) target = $region36
        $region35: #{tpu_custom_call.1} parent=27 // pred_region
          %210 = dma.done %s203, 256
        $region36: #{tpu_custom_call.1} parent=27 // pred_fallthru
          _
        %s211 = sand.u32 %s48, 1
        %s212 = scalar_lea.sflag [#allocation3], %s211
        %s213 = sand.u32 %s48, 1
        %s214 = smul.addr %s213, 16
        %s215 = scalar_lea.vmem [#allocation2], %s214
        %p216 = pneg %p61
        %p217 = pneg %p58
        %s218 = sand.u32 %s80, 1
        %s219 = scalar_lea.sflag [#allocation6], %s218
        %s220 = sand.u32 %s80, 1
        %s221 = smul.addr %s220, 16
        %s222 = scalar_lea.vmem [#allocation5], %s221
        %p223 = pneg %p93
        %p224 = pneg %p90
        %p225 = pneg %p119
        %p226 = pneg %p116
        %s227 = sand.u32 %s106, 1
        %s228 = scalar_lea.sflag [#allocation4], %s227
        %s229 = sand.u32 %s106, 1
        %s230 = smul.addr %s229, 8
        %s231 = scalar_lea.vmem [#allocation7], %s230
        %s232 = sadd.s32 %s26, %s27
        %p233 = scmp.lt.s32.totalorder %s232, 0
        %s234 = scalar_select %p233, %s232, 0
        %s235 = smul.u32 2, %s234
        %s236 = sadd.s32 %s26, %s27
        %p237 = scmp.lt.s32.totalorder %s236, 0
        %s238 = scalar_select %p237, %s236, 0
        %s239 = smul.u32 2, %s238
        %p240 = scmp.eq.s32.totalorder %s27, 0
        // Predicated region
        $region37: #{tpu_custom_call.1} parent=27 // pred_check
          %p241 = pneg %p240
        $region38: #{tpu_custom_call.1} parent=27 // pred_check_branch
          %243 = sbr.rel (%p241) target = $region40
        $region39: #{tpu_custom_call.1} parent=27 // pred_region
          %244 = vst [vmem:[%s231] sm:$0xff] 0.0
        $region40: #{tpu_custom_call.1} parent=27 // pred_fallthru
          _
        %s245 = sadd.s32 %s26, %s27
        %s246 = sadd.s32 %s245, 1
        %s247 = smul.u32 %s246, 16
        %p248 = scmp.le.s32.totalorder %s247, 16
        // Predicated region
        $region41: #{tpu_custom_call.1} parent=27 // pred_check
          %p249 = pneg %p248
        $region42: #{tpu_custom_call.1} parent=27 // pred_check_branch
          %251 = sbr.rel (%p249) target = $region44
        $region43: #{tpu_custom_call.1} parent=27 // pred_region
          %v252 = vld [vmem:[%s197] sm:$0xff]
          %v253 = vld [vmem:[%s197 + $0x8] sm:$0xff]
          %v254 = vld [vmem:[%s206] sm:$0xff]
          %v255 = vld [vmem:[%s206 + $0x8] sm:$0xff]
          %v256 = vmax.f32 %v252, 0.0
          %v257 = vmax.f32 %v253, 0.0
          %v258 = vmul.f32 %v252, %v254
          %v259 = vmul.f32 %v253, %v255
          %v260 = vsub.f32 %v256, %v258
          %v261 = vsub.f32 %v257, %v259
          %v262 = vand.u32 2147483647, %v252
          %v263 = vand.u32 2147483647, %v253
          %v264 = vsub.f32 0.0, %v262
          %v265 = vsub.f32 0.0, %v263
          %v266 = vmul.f32 %v264, 1.442695
          %v267 = vpow.pop %v266
          %v268 = vmul.f32 %v265, 1.442695
          %v269 = vpow.pop %v268
          %v270 = vadd.f32 %v267, 1.0
          %v271 = vlog2.pop %v270
          %v272 = vmul.f32 %v271, 0.6931472
          %v273 = vmul.f32 -0.5, %v267
          %v274 = vadd.f32 %v273, 1.0
          %v275 = vmul.f32 %v274, %v267
          %v276 = vand.u32 2147483647, %v267
          %vm277 = vcmp.lt.f32.partialorder %v276, 0.0004427343
          %v278 = vsel %vm277, %v275, %v272
          %v279 = vadd.f32 %v269, 1.0
          %v280 = vlog2.pop %v279
          %v281 = vmul.f32 %v280, 0.6931472
          %v282 = vmul.f32 -0.5, %v269
          %v283 = vadd.f32 %v282, 1.0
          %v284 = vmul.f32 %v283, %v269
          %v285 = vand.u32 2147483647, %v269
          %vm286 = vcmp.lt.f32.partialorder %v285, 0.0004427343
          %v287 = vsel %vm286, %v284, %v281
          %v288 = vadd.f32 %v260, %v278
          %v289 = vadd.f32 %v261, %v287
          %v290 = vsub.f32 0.0, %v288
          %v291 = vsub.f32 0.0, %v289
          %v292 = vmul.f32 %v290, 1.442695
          %v293 = vpow.pop %v292
          %v294 = vmul.f32 %v291, 1.442695
          %v295 = vpow.pop %v294
          %v296 = vsub.f32 1.0, %v293
          %v297 = vsub.f32 1.0, %v295
          %v298 = vmul.f32 %v296, %v296
          %v299 = vmul.f32 %v297, %v297
          %v300 = vmul.f32 %v298, %v288
          %v301 = vmul.f32 %v299, %v289
          %v302 = vld [vmem:[%s231] sm:$0xff]
          %v303 = vadd.f32 %v300, %v301
          %v304 = vadd.f32 %v302, %v303
          %305 = vst [vmem:[%s231] sm:$0xff] %v304
        $region44: #{tpu_custom_call.1} parent=27 // pred_fallthru
          _
        %p306 = scmp.gt.s32.totalorder %s247, 16
        // Predicated region
        $region45: #{tpu_custom_call.1} parent=27 // pred_check
          %p307 = pneg %p306
        $region46: #{tpu_custom_call.1} parent=27 // pred_check_branch
          %309 = sbr.rel (%p307) target = $region48
        $region47: #{tpu_custom_call.1} parent=27 // pred_region
          %v310 = vld [vmem:[%s197] sm:$0xff]
          %v311 = vld [vmem:[%s197 + $0x8] sm:$0xff]
          %v312 = vld [vmem:[%s206] sm:$0xff]
          %v313 = vld [vmem:[%s206 + $0x8] sm:$0xff]
          %v314 = vmax.f32 %v310, 0.0
          %v315 = vmax.f32 %v311, 0.0
          %v316 = vmul.f32 %v310, %v312
          %v317 = vmul.f32 %v311, %v313
          %v318 = vsub.f32 %v314, %v316
          %v319 = vsub.f32 %v315, %v317
          %v320 = vand.u32 2147483647, %v310
          %v321 = vand.u32 2147483647, %v311
          %v322 = vsub.f32 0.0, %v320
          %v323 = vsub.f32 0.0, %v321
          %v324 = vmul.f32 %v322, 1.442695
          %v325 = vpow.pop %v324
          %v326 = vmul.f32 %v323, 1.442695
          %v327 = vpow.pop %v326
          %v328 = vadd.f32 %v325, 1.0
          %v329 = vlog2.pop %v328
          %v330 = vmul.f32 %v329, 0.6931472
          %v331 = vmul.f32 -0.5, %v325
          %v332 = vadd.f32 %v331, 1.0
          %v333 = vmul.f32 %v332, %v325
          %v334 = vand.u32 2147483647, %v325
          %vm335 = vcmp.lt.f32.partialorder %v334, 0.0004427343
          %v336 = vsel %vm335, %v333, %v330
          %v337 = vadd.f32 %v327, 1.0
          %v338 = vlog2.pop %v337
          %v339 = vmul.f32 %v338, 0.6931472
          %v340 = vmul.f32 -0.5, %v327
          %v341 = vadd.f32 %v340, 1.0
          %v342 = vmul.f32 %v341, %v327
          %v343 = vand.u32 2147483647, %v327
          %vm344 = vcmp.lt.f32.partialorder %v343, 0.0004427343
          %v345 = vsel %vm344, %v342, %v339
          %v346 = vadd.f32 %v318, %v336
          %v347 = vadd.f32 %v319, %v345
          %v348 = vsub.f32 0.0, %v346
          %v349 = vsub.f32 0.0, %v347
          %v350 = vmul.f32 %v348, 1.442695
          %v351 = vpow.pop %v350
          %v352 = vmul.f32 %v349, 1.442695
          %v353 = vpow.pop %v352
          %v354 = vsub.f32 1.0, %v351
          %v355 = vsub.f32 1.0, %v353
          %v356 = vmul.f32 %v354, %v354
          %v357 = vmul.f32 %v355, %v355
          %v358 = vmul.f32 %v356, %v346
          %v359 = vmul.f32 %v357, %v347
          %s360 = smul.u32 %s245, 16
          %s361 = sadd.s32 %s360, 0
          %v362 = vlaneseq
          %v363 = vshrl.u32 %v362, 7
          %v364 = vadd.s32 %v363, 8
          %v365 = vstv %s361
          %v366 = vadd.s32 %v365, %v363
          %v367 = vadd.s32 %v365, %v364
          %vm368 = vcmp.lt.s32.totalorder %v366, 16
          %vm369 = vcmp.lt.s32.totalorder %v367, 16
          %v370 = vsel %vm368, 1, 0
          %v371 = vsel %vm369, 1, 0
          %vm372 = vcmp.eq.s32.totalorder %v370, 1
          %vm373 = vcmp.eq.s32.totalorder %v371, 1
          %v374 = vsel %vm372, %v358, 0.0
          %v375 = vsel %vm373, %v359, 0.0
          %v376 = vld [vmem:[%s231] sm:$0xff]
          %v377 = vadd.f32 %v374, %v375
          %v378 = vadd.f32 %v376, %v377
          %379 = vst [vmem:[%s231] sm:$0xff] %v378
        $region48: #{tpu_custom_call.1} parent=27 // pred_fallthru
          _
        %s380 = sand.u32 %s106, 1
        %s381 = scalar_lea.sflag [#allocation4], %s380
        %s382 = sand.u32 %s106, 1
        %s383 = smul.addr %s382, 8
        %s384 = scalar_lea.vmem [#allocation7], %s383
        // Predicated region
        $region49: #{tpu_custom_call.1} parent=27 // pred_check
          %p385 = pneg %p116
        $region50: #{tpu_custom_call.1} parent=27 // pred_check_branch
          %387 = sbr.rel (%p385) target = $region52
        $region51: #{tpu_custom_call.1} parent=27 // pred_region
          %s389 = ssub.s32 128, 128
          %390 = vsyncadd %s381, %s389
          %s391 = smul.addr %s26, 128
          %s392 = scalar_lea.hbm %s2, %s391
          %s394 = sshll.u32 %s384, 4
          %s395 = int_to_ptr.vmem [resolvable:$true] %s394
          %397 = dma.vmem_to_hbm [thread:$0]  %s395, 128, %s392, %s381
        $region52: #{tpu_custom_call.1} parent=27 // pred_fallthru
          _
      $region28: #{tpu_custom_call.1} parent=5 // pred_fallthru
        _
      %p398 = scmp.le.s32.totalorder 2, %s17
      // Predicated region
      $region53: #{tpu_custom_call.1} parent=5 // pred_check
        %p399 = pneg %p398
      $region54: #{tpu_custom_call.1} parent=5 // pred_check_branch
        %401 = sbr.rel (%p399) target = $region56
      $region55: #{tpu_custom_call.1} parent=5 // pred_region
        %s402 = ssub.s32 %s17, 2
        // Predicated region
        $region57: #{tpu_custom_call.1} parent=55 // pred_check
          %p403 = pneg %p122
        $region58: #{tpu_custom_call.1} parent=55 // pred_check_branch
          %405 = sbr.rel (%p403) target = $region60
        $region59: #{tpu_custom_call.1} parent=55 // pred_region
          %s406 = sand.u32 %s107, 1
          %s407 = scalar_lea.sflag [#allocation4], %s406
          %s408 = sand.u32 %s107, 1
          %s409 = smul.addr %s408, 8
          %s410 = scalar_lea.vmem [#allocation7], %s409
          %411 = dma.done %s407, 128
        $region60: #{tpu_custom_call.1} parent=55 // pred_fallthru
          _
      $region56: #{tpu_custom_call.1} parent=5 // pred_fallthru
        _
    $region6: #{tpu_custom_call.1} parent=1 // loop_footer
      %s21 = sadd.s32 1, %s17
    $region7: #{tpu_custom_call.1} parent=1 // loop_footer_branch
      %16 = sbr.rel target = $region3
    $region8: #{tpu_custom_call.1} parent=1 // loop_exit
      _
    %412 = vsyncpa [#allocation3], 1
    %s413 = scalar_lea.sflag [#allocation3], 1
    %414 = vsyncpa %s413, 1
    %415 = vsyncpa [#allocation6], 1
    %s416 = scalar_lea.sflag [#allocation6], 1
    %417 = vsyncpa %s416, 1
    %418 = vsyncpa [#allocation4], 1
    %s419 = scalar_lea.sflag [#allocation4], 1
    %420 = vsyncpa %s419, 1

</llo_original>
